<compile_context>
chip_gen: v7x
topology: tpu7x:2x2x1
jax: 0.10.0
libtpu: 0.0.40
codegen_flags: <defaults>
</compile_context>

<pallas_src>
import functools

import numpy as np
import jax
import jax.numpy as jnp
from jax.experimental import pallas as pl
from jax.experimental.pallas import tpu as pltpu


# ---------------------------------------------------------------------------
# Parameters (shape parity only — NEVER touched by forward(); kept out of the
# run/benchmark path per the perf review).
# ---------------------------------------------------------------------------
def make_params(key):
    # TODO(synk): nn.Linear(10, 10) x2 exist only for tensor-parallel plan
    # tests; forward() never consumes them, so they are not built in __main__.
    params = []
    for _ in range(2):
        k_w, k_b, key = jax.random.split(key, 3)
        w = jax.random.uniform(k_w, (10, 10), jnp.float32, -0.1, 0.1)
        b = jax.random.uniform(k_b, (10,), jnp.float32, -0.1, 0.1)
        params.append({"mlp.weight": w, "mlp.bias": b})
    return params


# ---------------------------------------------------------------------------
# Forward pass
# ---------------------------------------------------------------------------
def mock_gemma3_forward(x):
    """True MockGemma3Model.forward: identity. No kernel, no HBM traffic."""
    return x


def identity_kernel(x_ref, o_ref):
    o_ref[...] = x_ref[...]


def _round_down_mult(v, m):
    return max(m, (v // m) * m)


def mock_gemma3_forward_pallas(x, *, tile_s=512):
    """Identity as a Pallas kernel (kept only for kernel/test parity).

    Tiled over the seq axis so it pipelines (double-buffered) for large x;
    hidden stays the 128-lane axis; output aliases the input buffer.
    """
    S, H = x.shape
    if S <= tile_s:
        tile_s = S                       # full extent — always legal
    else:
        tile_s = _round_down_mult(min(tile_s, S), 8)  # vreg-aligned rows

    grid = (pl.cdiv(S, tile_s),)
    return pl.pallas_call(
        identity_kernel,
        out_shape=jax.ShapeDtypeStruct(x.shape, x.dtype),
        grid=grid,
        in_specs=[pl.BlockSpec((tile_s, H), lambda i: (i, 0))],
        out_specs=pl.BlockSpec((tile_s, H), lambda i: (i, 0)),
        # Output aliases the input HBM buffer -> no extra output allocation /
        # writeback when the caller donates x.
        input_output_aliases={0: 0},
        compiler_params=pltpu.CompilerParams(
            # "parallel" lets v7x shard the seq-tile loop across its 2 TCs;
            # harmless no-op on v5e/v6e (1 TC).
            dimension_semantics=("parallel",),
            # Conservative limit: safe on v7x (64 MiB physical VMEM) and
            # leaves ample headroom for double-buffering on v5e/v6e.
            vmem_limit_bytes=32 * 1024 * 1024,
        ),
    )(x)


@functools.partial(jax.jit, static_argnames=("tile_s",), donate_argnums=(0,))
def _jitted_pallas_identity(x, tile_s=512):
    return mock_gemma3_forward_pallas(x, tile_s=tile_s)


if __name__ == "__main__":
    key = jax.random.PRNGKey(0)

    # Small input consistent with the module (forward is shape-agnostic):
    # seq=256 rows, hidden=128 (lane axis), f32 -> 128 KiB.
    S, H = 256, 128
    x = jax.random.normal(key, (S, H), dtype=jnp.float32)

    # Host copy for verification (x is donated to the aliased kernel below).
    x_host = np.asarray(x)

    # Optimal forward per module semantics: pure identity, zero cost.
    assert mock_gemma3_forward(x) is x

    # Pallas parity path: tile_s=128 -> grid=(2,), exercises pipelining and
    # (on v7x) 2-TC sharding; output aliases the donated input buffer.
    out = _jitted_pallas_identity(x, tile_s=128)
    out = jax.block_until_ready(out)

    assert out.shape == x_host.shape and out.dtype == jnp.float32
    assert np.array_equal(np.asarray(out), x_host)

    print("KERNEL_OK")
</pallas_src>

<mosaic_0001>
module attributes {stable_mosaic.version = 11 : i64} {
  func.func @identity_kernel(%arg0: i32, %arg1: memref<128x128xf32, #tpu.memory_space<vmem>>, %arg2: memref<128x128xf32, #tpu.memory_space<vmem>>) attributes {dimension_semantics = [#tpu.dimension_semantics<parallel>], iteration_bounds = array<i64: 2>, scalar_prefetch = 0 : i64, scratch_operands = 0 : i64, tpu.core_type = #tpu.core_type<tc>, window_params = [{transform_indices = @transform_0, window_bounds = array<i64: 128, 128>}, {transform_indices = @transform_1, window_bounds = array<i64: 128, 128>}]} {
    %c0 = arith.constant 0 : index
    %c0_0 = arith.constant 0 : index
    %0 = vector.load %arg1[%c0, %c0_0] : memref<128x128xf32, #tpu.memory_space<vmem>>, vector<128x128xf32>
    %c0_1 = arith.constant 0 : index
    %c0_2 = arith.constant 0 : index
    %1 = vector.load %arg2[%c0_1, %c0_2] : memref<128x128xf32, #tpu.memory_space<vmem>>, vector<128x128xf32>
    tpu.vector_store %arg2[%c0_1, %c0_2], %0 {strides = array<i32>} : memref<128x128xf32, #tpu.memory_space<vmem>>, vector<128x128xf32>,
    return
  }
  func.func @transform_0(%arg0: i32) -> (i32, i32) {
    %c0_i32 = arith.constant 0 : i32
    %c0_i32_0 = arith.constant 0 : i32
    return %arg0, %c0_i32 : i32, i32
  }
  func.func @transform_1(%arg0: i32) -> (i32, i32) {
    %c0_i32 = arith.constant 0 : i32
    %c0_i32_0 = arith.constant 0 : i32
    return %arg0, %c0_i32 : i32, i32
  }
}

</mosaic_0001>

<llo_original>
// kernel: _jitted_pallas_identity.1
$region0: #{_jitted_pallas_identity.1}
  #allocation0 [shape = 'u32[]', space=smem, size = 0x4, offset = 0x4, fixed_abs, tag = 'smem constant byte address 0x4 - core index']
  #allocation1 [shape = 'u32[144,128]{1,0:T(1,128)}', space=vmem, size = 0x12000, scoped, tag = 'internal scratch']
  %s0 = inlined_call_operand.hbm [shape: f32[256,128], index: 0, kind: input, shape index: {}, may-alias: {0,1}]
  %s1 = inlined_call_operand.hbm [shape: f32[256,128], index: 1, kind: output, shape index: {}, may-alias: {0,1}]
  %s2 = sld [smem:[#allocation0]]
  $region41: #{_jitted_pallas_identity.1} parent=0
    _
  %s4 = ssub.s32 1, %s2
  %s5 = scalar_select 0, %s4, %s2
  $region1: #{_jitted_pallas_identity.1} parent=0
    #allocation2 [shape = 'u8[131072]{0}', space=vmem, size = 0x20000, scoped, tag = 'input window, operand 0']
    #allocation3 [shape = 's32[2]{0}', space=sflag, size = 0x8, scoped, tag = 'scoped memory for _jitted_pallas_identity.1']
    #allocation4 [shape = 's32[2]{0}', space=sflag, size = 0x8, scoped, tag = 'scoped memory for _jitted_pallas_identity.1']
    #allocation5 [shape = 'u8[131072]{0}', space=vmem, size = 0x20000, scoped, tag = 'output window, operand 0']
    %6 = vsyncpa [#allocation3], 0
    %s7 = scalar_lea.sflag [#allocation3], 1
    %8 = vsyncpa %s7, 0
    %9 = vsyncpa [#allocation4], 0
    %s10 = scalar_lea.sflag [#allocation4], 1
    %11 = vsyncpa %s10, 0
    loop: start=0, step=1, limit=4
    $region2: #{_jitted_pallas_identity.1} parent=1 // loop_pre_header
      _
    $region3: #{_jitted_pallas_identity.1} parent=1 // loop_header
      %s13 = sphi 0, %s17
      %p14 = scmp.ge.s32.totalorder %s13, 4
      %s23 = sphi 0, %s25
      %s26 = sphi 0, %s23
      %s27 = sphi 0, %s26
      %s43 = sphi 0, %s27
      %s49 = sphi 0, %s51
      %s52 = sphi 0, %s49
      %s53 = sphi 0, %s52
      %s69 = sphi 0, %s53
    $region4: #{_jitted_pallas_identity.1} parent=1 // loop_header_branch
      %16 = sbr.rel (%p14) target = $region8
    $region5: #{_jitted_pallas_identity.1} parent=1 // loop_body
      %s18 = ssub.s32 %s13, 1
      %s19 = ssub.s32 %s13, 2
      %s20 = sadd.s32 %s13, 1
      %s21 = ssub.s32 %s13, %s20
      %p22 = scmp.eq.s32.totalorder %s21, 0
      %s24 = sadd.s32 %s23, 1
      %s25 = scalar_select %p22, %s23, %s24
      %p28 = pneg %p22
      %p29 = scmp.eq.s32.totalorder %s13, 1
      %p30 = por %p28, %p29
      %p31 = scmp.ne.s32.totalorder %s23, %s26
      %p32 = scmp.eq.s32.totalorder %s13, 0
      %p33 = por %p31, %p32
      %p34 = scmp.ne.s32.totalorder %s23, %s26
      %p35 = scmp.eq.s32.totalorder %s18, 1
      %p36 = por %p34, %p35
      %p37 = scmp.ne.s32.totalorder %s26, %s27
      %p38 = scmp.eq.s32.totalorder %s18, 0
      %p39 = por %p37, %p38
      %p40 = scmp.ne.s32.totalorder %s26, %s27
      %p41 = scmp.eq.s32.totalorder %s19, 1
      %p42 = por %p40, %p41
      %p44 = scmp.ne.s32.totalorder %s27, %s43
      %p45 = scmp.eq.s32.totalorder %s19, 0
      %p46 = por %p44, %p45
      %s47 = ssub.s32 %s13, %s20
      %p48 = scmp.eq.s32.totalorder %s47, 0
      %s50 = sadd.s32 %s49, 1
      %s51 = scalar_select %p48, %s49, %s50
      %p54 = pneg %p48
      %p55 = scmp.eq.s32.totalorder %s13, 1
      %p56 = por %p54, %p55
      %p57 = scmp.ne.s32.totalorder %s49, %s52
      %p58 = scmp.eq.s32.totalorder %s13, 0
      %p59 = por %p57, %p58
      %p60 = scmp.ne.s32.totalorder %s49, %s52
      %p61 = scmp.eq.s32.totalorder %s18, 1
      %p62 = por %p60, %p61
      %p63 = scmp.ne.s32.totalorder %s52, %s53
      %p64 = scmp.eq.s32.totalorder %s18, 0
      %p65 = por %p63, %p64
      %p66 = scmp.ne.s32.totalorder %s52, %s53
      %p67 = scmp.eq.s32.totalorder %s19, 1
      %p68 = por %p66, %p67
      %p70 = scmp.ne.s32.totalorder %s53, %s69
      %p71 = scmp.eq.s32.totalorder %s19, 0
      %p72 = por %p70, %p71
      %p73 = scmp.le.s32.totalorder 1, %s13
      %p74 = scmp.lt.s32.totalorder %s13, 3
      %p75 = pnand %p73, %p74
      %p76 = pneg %p75
      // Predicated region
      $region9: #{_jitted_pallas_identity.1} parent=5 // pred_check
        _
      $region10: #{_jitted_pallas_identity.1} parent=5 // pred_check_branch
        %78 = sbr.rel (%p75) target = $region12
      $region11: #{_jitted_pallas_identity.1} parent=5 // pred_region
        %s79 = ssub.s32 %s13, 1
      $region12: #{_jitted_pallas_identity.1} parent=5 // pred_fallthru
        _
      %p80 = scmp.lt.s32.totalorder %s13, 2
      // Predicated region
      $region13: #{_jitted_pallas_identity.1} parent=5 // pred_check
        %p81 = pneg %p80
      $region14: #{_jitted_pallas_identity.1} parent=5 // pred_check_branch
        %83 = sbr.rel (%p81) target = $region16
      $region15: #{_jitted_pallas_identity.1} parent=5 // pred_region
        // Predicated region
        $region17: #{_jitted_pallas_identity.1} parent=15 // pred_check
          %p84 = pneg %p33
        $region18: #{_jitted_pallas_identity.1} parent=15 // pred_check_branch
          %86 = sbr.rel (%p84) target = $region20
        $region19: #{_jitted_pallas_identity.1} parent=15 // pred_region
          %s87 = sand.u32 %s23, 1
          %s88 = scalar_lea.sflag [#allocation3], %s87
          %s89 = sand.u32 %s23, 1
          %s90 = smul.addr %s89, 128
          %s91 = scalar_lea.vmem [#allocation2], %s90
          %s92 = smul.u32 16, %s13
          %s94 = ssub.s32 2048, 2048
          %95 = vsyncadd %s88, %s94
          %s96 = smul.addr %s92, 128
          %s97 = scalar_lea.hbm %s0, %s96
          %s98 = sshll.u32 %s91, 4
          %s99 = int_to_ptr.vmem [resolvable:$true] %s98
          %104 = dma.hbm_to_vmem [thread:$0]  %s97, 2048, %s99, %s88, 128, 128, 8
        $region20: #{_jitted_pallas_identity.1} parent=15 // pred_fallthru
          _
      $region16: #{_jitted_pallas_identity.1} parent=5 // pred_fallthru
        _
      %p105 = scmp.le.s32.totalorder 1, %s13
      %p106 = scmp.lt.s32.totalorder %s13, 3
      %p107 = pnand %p105, %p106
      %p108 = pneg %p107
      // Predicated region
      $region21: #{_jitted_pallas_identity.1} parent=5 // pred_check
        _
      $region22: #{_jitted_pallas_identity.1} parent=5 // pred_check_branch
        %110 = sbr.rel (%p107) target = $region24
      $region23: #{_jitted_pallas_identity.1} parent=5 // pred_region
        %s111 = ssub.s32 %s13, 1
        %s112 = sand.u32 %s26, 1
        %s113 = scalar_lea.sflag [#allocation3], %s112
        %s114 = sand.u32 %s26, 1
        %s115 = smul.addr %s114, 128
        %s116 = scalar_lea.vmem [#allocation2], %s115
        // Predicated region
        $region25: #{_jitted_pallas_identity.1} parent=23 // pred_check
          %p117 = pneg %p39
        $region26: #{_jitted_pallas_identity.1} parent=23 // pred_check_branch
          %119 = sbr.rel (%p117) target = $region28
        $region27: #{_jitted_pallas_identity.1} parent=23 // pred_region
          %120 = dma.done %s113, 2048
        $region28: #{_jitted_pallas_identity.1} parent=23 // pred_fallthru
          _
        %s121 = sand.u32 %s26, 1
        %s122 = scalar_lea.sflag [#allocation3], %s121
        %s123 = sand.u32 %s26, 1
        %s124 = smul.addr %s123, 128
        %s125 = scalar_lea.vmem [#allocation2], %s124
        %p126 = pneg %p39
        %p127 = pneg %p36
        %p128 = pneg %p65
        %p129 = pneg %p62
        %s130 = sand.u32 %s52, 1
        %s131 = scalar_lea.sflag [#allocation4], %s130
        %s132 = sand.u32 %s52, 1
        %s133 = smul.addr %s132, 128
        %s134 = scalar_lea.vmem [#allocation5], %s133
        %s135 = smul.u32 16, %s18
        %s136 = smul.u32 16, %s18
        %v137 = vld [vmem:[%s116] sm:$0xff]
        %v138 = vld [vmem:[%s116 + $0x8] sm:$0xff]
        %v139 = vld [vmem:[%s116 + $0x10] sm:$0xff]
        %v140 = vld [vmem:[%s116 + $0x18] sm:$0xff]
        %v141 = vld [vmem:[%s116 + $0x20] sm:$0xff]
        %v142 = vld [vmem:[%s116 + $0x28] sm:$0xff]
        %v143 = vld [vmem:[%s116 + $0x30] sm:$0xff]
        %v144 = vld [vmem:[%s116 + $0x38] sm:$0xff]
        %v145 = vld [vmem:[%s116 + $0x40] sm:$0xff]
        %v146 = vld [vmem:[%s116 + $0x48] sm:$0xff]
        %v147 = vld [vmem:[%s116 + $0x50] sm:$0xff]
        %v148 = vld [vmem:[%s116 + $0x58] sm:$0xff]
        %v149 = vld [vmem:[%s116 + $0x60] sm:$0xff]
        %v150 = vld [vmem:[%s116 + $0x68] sm:$0xff]
        %v151 = vld [vmem:[%s116 + $0x70] sm:$0xff]
        %v152 = vld [vmem:[%s116 + $0x78] sm:$0xff]
        %153 = vst [vmem:[%s134] sm:$0xff] %v137
        %154 = vst [vmem:[%s134 + $0x8] sm:$0xff] %v138
        %155 = vst [vmem:[%s134 + $0x10] sm:$0xff] %v139
        %156 = vst [vmem:[%s134 + $0x18] sm:$0xff] %v140
        %157 = vst [vmem:[%s134 + $0x20] sm:$0xff] %v141
        %158 = vst [vmem:[%s134 + $0x28] sm:$0xff] %v142
        %159 = vst [vmem:[%s134 + $0x30] sm:$0xff] %v143
        %160 = vst [vmem:[%s134 + $0x38] sm:$0xff] %v144
        %161 = vst [vmem:[%s134 + $0x40] sm:$0xff] %v145
        %162 = vst [vmem:[%s134 + $0x48] sm:$0xff] %v146
        %163 = vst [vmem:[%s134 + $0x50] sm:$0xff] %v147
        %164 = vst [vmem:[%s134 + $0x58] sm:$0xff] %v148
        %165 = vst [vmem:[%s134 + $0x60] sm:$0xff] %v149
        %166 = vst [vmem:[%s134 + $0x68] sm:$0xff] %v150
        %167 = vst [vmem:[%s134 + $0x70] sm:$0xff] %v151
        %168 = vst [vmem:[%s134 + $0x78] sm:$0xff] %v152
        %s169 = sand.u32 %s52, 1
        %s170 = scalar_lea.sflag [#allocation4], %s169
        %s171 = sand.u32 %s52, 1
        %s172 = smul.addr %s171, 128
        %s173 = scalar_lea.vmem [#allocation5], %s172
        // Predicated region
        $region29: #{_jitted_pallas_identity.1} parent=23 // pred_check
          %p174 = pneg %p62
        $region30: #{_jitted_pallas_identity.1} parent=23 // pred_check_branch
          %176 = sbr.rel (%p174) target = $region32
        $region31: #{_jitted_pallas_identity.1} parent=23 // pred_region
          %s177 = smul.u32 16, %s18
          %s179 = ssub.s32 2048, 2048
          %180 = vsyncadd %s170, %s179
          %s181 = smul.addr %s177, 128
          %s182 = scalar_lea.hbm %s1, %s181
          %s183 = sshll.u32 %s173, 4
          %s184 = int_to_ptr.vmem [resolvable:$true] %s183
          %189 = dma.vmem_to_hbm [thread:$0]  %s184, 2048, %s182, %s170, 128, 128, 8
        $region32: #{_jitted_pallas_identity.1} parent=23 // pred_fallthru
          _
      $region24: #{_jitted_pallas_identity.1} parent=5 // pred_fallthru
        _
      %p190 = scmp.le.s32.totalorder 2, %s13
      // Predicated region
      $region33: #{_jitted_pallas_identity.1} parent=5 // pred_check
        %p191 = pneg %p190
      $region34: #{_jitted_pallas_identity.1} parent=5 // pred_check_branch
        %193 = sbr.rel (%p191) target = $region36
      $region35: #{_jitted_pallas_identity.1} parent=5 // pred_region
        %s194 = ssub.s32 %s13, 2
        // Predicated region
        $region37: #{_jitted_pallas_identity.1} parent=35 // pred_check
          %p195 = pneg %p68
        $region38: #{_jitted_pallas_identity.1} parent=35 // pred_check_branch
          %197 = sbr.rel (%p195) target = $region40
        $region39: #{_jitted_pallas_identity.1} parent=35 // pred_region
          %s198 = sand.u32 %s53, 1
          %s199 = scalar_lea.sflag [#allocation4], %s198
          %s200 = sand.u32 %s53, 1
          %s201 = smul.addr %s200, 128
          %s202 = scalar_lea.vmem [#allocation5], %s201
          %203 = dma.done %s199, 2048
        $region40: #{_jitted_pallas_identity.1} parent=35 // pred_fallthru
          _
      $region36: #{_jitted_pallas_identity.1} parent=5 // pred_fallthru
        _
    $region6: #{_jitted_pallas_identity.1} parent=1 // loop_footer
      %s17 = sadd.s32 1, %s13
    $region7: #{_jitted_pallas_identity.1} parent=1 // loop_footer_branch
      %12 = sbr.rel target = $region3
    $region8: #{_jitted_pallas_identity.1} parent=1 // loop_exit
      _
    %204 = vsyncpa [#allocation3], 1
    %s205 = scalar_lea.sflag [#allocation3], 1
    %206 = vsyncpa %s205, 1
    %207 = vsyncpa [#allocation4], 1
    %s208 = scalar_lea.sflag [#allocation4], 1
    %209 = vsyncpa %s208, 1

</llo_original>
